<compile_context>
chip_gen: v5e
topology: v5e:2x2
jax: 0.10.0
libtpu: 0.0.40
codegen_flags: <defaults>
</compile_context>

<pallas_src>
import functools

import jax
import jax.numpy as jnp
from jax.experimental import pallas as pl
from jax.experimental.pallas import tpu as pltpu

_PAIRWISE_EPS = 1e-6  # matches F.pairwise_distance default eps


def _round_up(x, m):
    return (x + m - 1) // m * m


def _contrastive_kernel(o1_ref, o2_ref, lbl_ref, out_ref, acc_ref, *,
                        margin, batch, tile_b):
    i = pl.program_id(0)

    @pl.when(i == 0)
    def _init():
        acc_ref[...] = jnp.zeros_like(acc_ref)

    # Cast to f32 in-kernel (inputs may be bf16 in HBM; v5e VPU has no bf16).
    o1 = o1_ref[...].astype(jnp.float32)                     # (TILE_B, D)
    o2 = o2_ref[...].astype(jnp.float32)                     # (TILE_B, D)
    lbl = lbl_ref[...].astype(jnp.float32)                   # (TILE_B, 1)

    # F.pairwise_distance adds eps elementwise before the norm.
    diff = o1 - o2 + _PAIRWISE_EPS                           # VPU
    sumsq = jnp.sum(diff * diff, axis=-1, keepdims=True)     # (TILE_B, 1) XLU
    dist = jnp.sqrt(sumsq)                                   # EUP
    hinge = jnp.maximum(margin - dist, 0.0)
    # Reuse sumsq (== dist**2) for the similar-pair term.
    per_row = (1.0 - lbl) * sumsq + lbl * (hinge * hinge)    # (TILE_B, 1)

    # Mask padded rows in the (possibly partial) last tile.
    row = jax.lax.broadcasted_iota(jnp.int32, (tile_b, 1), 0) + i * tile_b
    per_row = jnp.where(row < batch, per_row, 0.0)

    acc_ref[...] += per_row                                  # steady state: VPU only

    @pl.when(i == pl.num_programs(0) - 1)
    def _finalize():
        total = jnp.sum(acc_ref[...])                        # one reduce, off the hot loop
        out_ref[...] = (total / jnp.float32(batch)).reshape(1, 1)


def contrastive_loss(output1, output2, label, margin=1.25, tile_rows=None):
    assert output1.shape == output2.shape and output1.ndim == 2
    B, D = output1.shape

    # Labels are tiny: cast/reshape in the wrapper. Embeddings stay in their
    # native dtype (do NOT upcast here -- that would double HBM traffic).
    lbl = label.astype(jnp.float32).reshape(B, 1)

    itemsize = jnp.dtype(output1.dtype).itemsize
    if tile_rows is None:
        # ~2 MiB per input tile: big enough to hide ~0.35us/step overhead,
        # small enough that 2 inputs x 2 pipeline buffers fit every generation.
        target_bytes = 2 * 1024 * 1024
        tile_rows = max(8, (target_bytes // max(1, D * itemsize)) // 8 * 8)
    tile_b = int(min(max(8, _round_up(int(tile_rows), 8)), _round_up(B, 8)))
    num_tiles = pl.cdiv(B, tile_b)

    tile_bytes = tile_b * D * itemsize
    # 2 inputs x 2 buffers per tile + slack; capped below v7x's 64 MiB VMEM.
    vmem_limit = int(min(64 << 20, max(16 << 20, 4 * tile_bytes + (4 << 20))))

    cost = pl.CostEstimate(
        flops=4 * B * D + 12 * B,
        transcendentals=B,                                   # one sqrt per row
        bytes_accessed=2 * B * D * itemsize + 4 * B + 4,
    )

    kernel = functools.partial(
        _contrastive_kernel, margin=float(margin), batch=B, tile_b=tile_b)

    out = pl.pallas_call(
        kernel,
        out_shape=jax.ShapeDtypeStruct((1, 1), jnp.float32),
        grid_spec=pltpu.PrefetchScalarGridSpec(
            num_scalar_prefetch=0,
            grid=(num_tiles,),
            in_specs=[
                pl.BlockSpec((tile_b, D), lambda i: (i, 0)),
                pl.BlockSpec((tile_b, D), lambda i: (i, 0)),
                pl.BlockSpec((tile_b, 1), lambda i: (i, 0)),
            ],
            out_specs=pl.BlockSpec((1, 1), lambda i: (0, 0)),
            scratch_shapes=[pltpu.VMEM((tile_b, 1), jnp.float32)],
        ),
        compiler_params=pltpu.CompilerParams(
            dimension_semantics=("arbitrary",),              # reduction axis
            vmem_limit_bytes=vmem_limit,
        ),
        cost_estimate=cost,
    )(output1, output2, lbl)
    # TODO(synk): on v7x (2 TensorCores) split the batch with a leading
    # "parallel" grid axis producing two partial sums; single-core here.
    return out[0, 0]


def _reference_loss(output1, output2, label, margin=1.25):
    # Pure-JAX reference mirroring the PyTorch forward exactly.
    label = label.astype(jnp.float32)
    o1 = output1.astype(jnp.float32)
    o2 = output2.astype(jnp.float32)
    dist = jnp.linalg.norm(o1 - o2 + _PAIRWISE_EPS, axis=-1)
    return jnp.mean(
        (1.0 - label) * dist ** 2
        + label * jnp.clip(margin - dist, 0.0, None) ** 2
    )


if __name__ == "__main__":
    key = jax.random.PRNGKey(0)
    k1, k2, k3 = jax.random.split(key, 3)

    # Small synthetic shapes; B=40 with tile_rows=16 exercises multiple grid
    # steps plus a masked partial last tile (40 = 16 + 16 + 8).
    B, D = 40, 32
    output1 = jax.random.normal(k1, (B, D), dtype=jnp.float32)
    output2 = jax.random.normal(k2, (B, D), dtype=jnp.float32)
    label = jax.random.bernoulli(k3, 0.5, (B,)).astype(jnp.int32)

    loss = contrastive_loss(output1, output2, label, margin=1.25, tile_rows=16)
    loss = jax.block_until_ready(loss)

    ref = _reference_loss(output1, output2, label, margin=1.25)
    assert jnp.allclose(loss, ref, rtol=1e-5, atol=1e-5), (loss, ref)

    print("KERNEL_OK")
</pallas_src>

<mosaic_0001>
module attributes {stable_mosaic.version = 11 : i64} {
  func.func @_contrastive_kernel(%arg0: i32, %arg1: memref<16x32xf32, #tpu.memory_space<vmem>>, %arg2: memref<16x32xf32, #tpu.memory_space<vmem>>, %arg3: memref<16x1xf32, #tpu.memory_space<vmem>>, %arg4: memref<1x1xf32, #tpu.memory_space<vmem>>, %arg5: memref<16x1xf32, #tpu.memory_space<vmem>>) attributes {dimension_semantics = [#tpu.dimension_semantics<arbitrary>], iteration_bounds = array<i64: 3>, scalar_prefetch = 0 : i64, scratch_operands = 1 : i64, tpu.core_type = #tpu.core_type<tc>, window_params = [{transform_indices = @transform_0, window_bounds = array<i64: 16, 32>}, {transform_indices = @transform_1, window_bounds = array<i64: 16, 32>}, {transform_indices = @transform_2, window_bounds = array<i64: 16, 1>}, {pipeline_mode = #tpu.pipeline_mode<synchronous>, transform_indices = @transform_3, window_bounds = array<i64: 1, 1>}]} {
    %c0_i32 = arith.constant 0 : i32
    %0 = arith.cmpi eq, %arg0, %c0_i32 : i32
    %1 = arith.extui %0 : i1 to i32
    %c0_i32_0 = arith.constant 0 : i32
    %2 = arith.cmpi ne, %1, %c0_i32_0 : i32
    scf.if %2 {
      %cst_16 = arith.constant 0.000000e+00 : f32
      %37 = vector.broadcast %cst_16 : f32 to vector<16x1xf32>
      %c0_17 = arith.constant 0 : index
      %c0_18 = arith.constant 0 : index
      %38 = vector.load %arg5[%c0_17, %c0_18] : memref<16x1xf32, #tpu.memory_space<vmem>>, vector<16x1xf32>
      tpu.vector_store %arg5[%c0_17, %c0_18], %37 {strides = array<i32>} : memref<16x1xf32, #tpu.memory_space<vmem>>, vector<16x1xf32>,
    } else {
    }
    %c0 = arith.constant 0 : index
    %c0_1 = arith.constant 0 : index
    %3 = vector.load %arg1[%c0, %c0_1] : memref<16x32xf32, #tpu.memory_space<vmem>>, vector<16x32xf32>
    %c0_2 = arith.constant 0 : index
    %c0_3 = arith.constant 0 : index
    %4 = vector.load %arg2[%c0_2, %c0_3] : memref<16x32xf32, #tpu.memory_space<vmem>>, vector<16x32xf32>
    %c0_4 = arith.constant 0 : index
    %c0_5 = arith.constant 0 : index
    %5 = vector.load %arg3[%c0_4, %c0_5] : memref<16x1xf32, #tpu.memory_space<vmem>>, vector<16x1xf32>
    %6 = arith.subf %3, %4 : vector<16x32xf32>
    %cst = arith.constant 9.99999997E-7 : f32
    %7 = vector.broadcast %cst : f32 to vector<16x32xf32>
    %8 = arith.addf %6, %7 : vector<16x32xf32>
    %9 = arith.mulf %8, %8 : vector<16x32xf32>
    %cst_6 = arith.constant dense<0.000000e+00> : vector<16xf32>
    %10 = vector.multi_reduction <add>, %9, %cst_6 [1] : vector<16x32xf32> to vector<16xf32>
    %11 = vector.shape_cast %10 : vector<16xf32> to vector<16x1xf32>
    %12 = math.sqrt %11 : vector<16x1xf32>
    %cst_7 = arith.constant 1.250000e+00 : f32
    %13 = vector.broadcast %cst_7 : f32 to vector<16x1xf32>
    %14 = arith.subf %13, %12 : vector<16x1xf32>
    %cst_8 = arith.constant 0.000000e+00 : f32
    %15 = vector.broadcast %cst_8 : f32 to vector<16x1xf32>
    %16 = arith.maximumf %14, %15 : vector<16x1xf32>
    %cst_9 = arith.constant 1.000000e+00 : f32
    %17 = vector.broadcast %cst_9 : f32 to vector<16x1xf32>
    %18 = arith.subf %17, %5 : vector<16x1xf32>
    %19 = arith.mulf %18, %11 : vector<16x1xf32>
    %20 = arith.mulf %16, %16 : vector<16x1xf32>
    %21 = arith.mulf %5, %20 : vector<16x1xf32>
    %22 = arith.addf %19, %21 : vector<16x1xf32>
    %23 = tpu.iota {dimensions = array<i32: 0>} : vector<16x1xi32>
    %c16_i32 = arith.constant 16 : i32
    %24 = arith.muli %arg0, %c16_i32 : i32
    %25 = vector.broadcast %24 : i32 to vector<16x1xi32>
    %26 = arith.addi %23, %25 : vector<16x1xi32>
    %c40_i32 = arith.constant 40 : i32
    %27 = vector.broadcast %c40_i32 : i32 to vector<16x1xi32>
    %28 = arith.cmpi slt, %26, %27 : vector<16x1xi32>
    %cst_10 = arith.constant 0.000000e+00 : f32
    %29 = vector.broadcast %cst_10 : f32 to vector<16x1xf32>
    %30 = arith.select %28, %22, %29 : vector<16x1xi1>, vector<16x1xf32>
    %c0_11 = arith.constant 0 : index
    %c0_12 = arith.constant 0 : index
    %31 = vector.load %arg5[%c0_11, %c0_12] : memref<16x1xf32, #tpu.memory_space<vmem>>, vector<16x1xf32>
    %32 = arith.addf %31, %30 : vector<16x1xf32>
    %c0_13 = arith.constant 0 : index
    %c0_14 = arith.constant 0 : index
    %33 = vector.load %arg5[%c0_13, %c0_14] : memref<16x1xf32, #tpu.memory_space<vmem>>, vector<16x1xf32>
    tpu.vector_store %arg5[%c0_13, %c0_14], %32 {strides = array<i32>} : memref<16x1xf32, #tpu.memory_space<vmem>>, vector<16x1xf32>,
    %c2_i32 = arith.constant 2 : i32
    %34 = arith.cmpi eq, %arg0, %c2_i32 : i32
    %35 = arith.extui %34 : i1 to i32
    %c0_i32_15 = arith.constant 0 : i32
    %36 = arith.cmpi ne, %35, %c0_i32_15 : i32
    scf.if %36 {
      %c0_16 = arith.constant 0 : index
      %c0_17 = arith.constant 0 : index
      %37 = vector.load %arg5[%c0_16, %c0_17] : memref<16x1xf32, #tpu.memory_space<vmem>>, vector<16x1xf32>
      %38 = vector.shape_cast %37 : vector<16x1xf32> to vector<1x16x1xf32>
      %cst_18 = arith.constant dense<0.000000e+00> : vector<1xf32>
      %39 = vector.multi_reduction <add>, %38, %cst_18 [1, 2] : vector<1x16x1xf32> to vector<1xf32>
      %40 = vector.shape_cast %39 : vector<1xf32> to vector<1x1x1xf32>
      %41 = vector.extract %40[0, 0, 0] : f32 from vector<1x1x1xf32>
      %cst_19 = arith.constant 4.000000e+01 : f32
      %42 = arith.divf %41, %cst_19 : f32
      %43 = vector.broadcast %42 : f32 to vector<1x1xf32>
      %c0_20 = arith.constant 0 : index
      %c0_21 = arith.constant 0 : index
      %44 = vector.load %arg4[%c0_20, %c0_21] : memref<1x1xf32, #tpu.memory_space<vmem>>, vector<1x1xf32>
      tpu.vector_store %arg4[%c0_20, %c0_21], %43 {strides = array<i32>} : memref<1x1xf32, #tpu.memory_space<vmem>>, vector<1x1xf32>,
    } else {
    }
    return
  }
  func.func @transform_0(%arg0: i32) -> (i32, i32) {
    %c0_i32 = arith.constant 0 : i32
    %c0_i32_0 = arith.constant 0 : i32
    return %arg0, %c0_i32 : i32, i32
  }
  func.func @transform_1(%arg0: i32) -> (i32, i32) {
    %c0_i32 = arith.constant 0 : i32
    %c0_i32_0 = arith.constant 0 : i32
    return %arg0, %c0_i32 : i32, i32
  }
  func.func @transform_2(%arg0: i32) -> (i32, i32) {
    %c0_i32 = arith.constant 0 : i32
    %c0_i32_0 = arith.constant 0 : i32
    return %arg0, %c0_i32 : i32, i32
  }
  func.func @transform_3(%arg0: i32) -> (i32, i32) {
    %c0_i32 = arith.constant 0 : i32
    %c0_i32_0 = arith.constant 0 : i32
    %c0_i32_1 = arith.constant 0 : i32
    return %c0_i32, %c0_i32_0 : i32, i32
  }
}

</mosaic_0001>

<llo_original>
// kernel: tpu_custom_call.1
$region0: #{tpu_custom_call.1}
  #allocation0 [shape = 'u32[]', space=smem, size = 0x4, offset = 0x4, fixed_abs, tag = 'smem constant byte address 0x4 - core index']
  #allocation1 [shape = 'u32[72,128]{1,0:T(1,128)}', space=vmem, size = 0x9000, scoped, tag = 'internal scratch']
  #allocation2 [shape = 'f32[16,1]{1,0:T(8,128)}', space=vmem, size = 0x2000, scoped, tag = 'scratch operand']
  %s0 = inlined_call_operand.vmem [shape: f32[40,32], index: 0, kind: input, shape index: {}]
  %s1 = inlined_call_operand.vmem [shape: f32[40,32], index: 1, kind: input, shape index: {}]
  %s2 = inlined_call_operand.vmem [shape: f32[40,1], index: 2, kind: input, shape index: {}]
  %s3 = inlined_call_operand.hbm [shape: f32[1,1], index: 3, kind: output, shape index: {}]
  %s4 = sld [smem:[#allocation0]]
  $region53: #{tpu_custom_call.1} parent=0
    _
  %s6 = ssub.s32 1, %s4
  %s7 = scalar_select 0, %s6, %s4
  $region1: #{tpu_custom_call.1} parent=0
    #allocation3 [shape = 'u8[512]{0}', space=vmem, size = 0x400, scoped, tag = 'output window, operand 0, single buffered']
    #allocation4 [shape = 's32[2]{0}', space=sflag, size = 0x8, scoped, tag = 'scoped memory for tpu_custom_call.1']
    %8 = vsyncpa [#allocation4], 0
    loop: start=0, step=1, limit=5
    $region2: #{tpu_custom_call.1} parent=1 // loop_pre_header
      _
    $region3: #{tpu_custom_call.1} parent=1 // loop_header
      %s10 = sphi 0, %s14
      %p11 = scmp.ge.s32.totalorder %s10, 5
      %s20 = sphi 0, %s22
      %s23 = sphi 0, %s20
      %s24 = sphi 0, %s23
      %s40 = sphi 0, %s24
      %s46 = sphi 0, %s48
      %s49 = sphi 0, %s46
      %s50 = sphi 0, %s49
      %s66 = sphi 0, %s50
      %s72 = sphi 0, %s74
      %s75 = sphi 0, %s72
      %s76 = sphi 0, %s75
      %s92 = sphi 0, %s76
      %s96 = sphi 0, %s96
      %s98 = sphi 0, %s96
      %s99 = sphi 0, %s98
      %s113 = sphi 0, %s99
    $region4: #{tpu_custom_call.1} parent=1 // loop_header_branch
      %13 = sbr.rel (%p11) target = $region8
    $region5: #{tpu_custom_call.1} parent=1 // loop_body
      %s15 = ssub.s32 %s10, 1
      %s16 = ssub.s32 %s10, 2
      %s17 = sadd.s32 %s10, 1
      %s18 = ssub.s32 %s10, %s17
      %p19 = scmp.eq.s32.totalorder %s18, 0
      %s21 = sadd.s32 %s20, 1
      %s22 = scalar_select %p19, %s20, %s21
      %p25 = pneg %p19
      %p26 = scmp.eq.s32.totalorder %s10, 2
      %p27 = por %p25, %p26
      %p28 = scmp.ne.s32.totalorder %s20, %s23
      %p29 = scmp.eq.s32.totalorder %s10, 0
      %p30 = por %p28, %p29
      %p31 = scmp.ne.s32.totalorder %s20, %s23
      %p32 = scmp.eq.s32.totalorder %s15, 2
      %p33 = por %p31, %p32
      %p34 = scmp.ne.s32.totalorder %s23, %s24
      %p35 = scmp.eq.s32.totalorder %s15, 0
      %p36 = por %p34, %p35
      %p37 = scmp.ne.s32.totalorder %s23, %s24
      %p38 = scmp.eq.s32.totalorder %s16, 2
      %p39 = por %p37, %p38
      %p41 = scmp.ne.s32.totalorder %s24, %s40
      %p42 = scmp.eq.s32.totalorder %s16, 0
      %p43 = por %p41, %p42
      %s44 = ssub.s32 %s10, %s17
      %p45 = scmp.eq.s32.totalorder %s44, 0
      %s47 = sadd.s32 %s46, 1
      %s48 = scalar_select %p45, %s46, %s47
      %p51 = pneg %p45
      %p52 = scmp.eq.s32.totalorder %s10, 2
      %p53 = por %p51, %p52
      %p54 = scmp.ne.s32.totalorder %s46, %s49
      %p55 = scmp.eq.s32.totalorder %s10, 0
      %p56 = por %p54, %p55
      %p57 = scmp.ne.s32.totalorder %s46, %s49
      %p58 = scmp.eq.s32.totalorder %s15, 2
      %p59 = por %p57, %p58
      %p60 = scmp.ne.s32.totalorder %s49, %s50
      %p61 = scmp.eq.s32.totalorder %s15, 0
      %p62 = por %p60, %p61
      %p63 = scmp.ne.s32.totalorder %s49, %s50
      %p64 = scmp.eq.s32.totalorder %s16, 2
      %p65 = por %p63, %p64
      %p67 = scmp.ne.s32.totalorder %s50, %s66
      %p68 = scmp.eq.s32.totalorder %s16, 0
      %p69 = por %p67, %p68
      %s70 = ssub.s32 %s10, %s17
      %p71 = scmp.eq.s32.totalorder %s70, 0
      %s73 = sadd.s32 %s72, 1
      %s74 = scalar_select %p71, %s72, %s73
      %p77 = pneg %p71
      %p78 = scmp.eq.s32.totalorder %s10, 2
      %p79 = por %p77, %p78
      %p80 = scmp.ne.s32.totalorder %s72, %s75
      %p81 = scmp.eq.s32.totalorder %s10, 0
      %p82 = por %p80, %p81
      %p83 = scmp.ne.s32.totalorder %s72, %s75
      %p84 = scmp.eq.s32.totalorder %s15, 2
      %p85 = por %p83, %p84
      %p86 = scmp.ne.s32.totalorder %s75, %s76
      %p87 = scmp.eq.s32.totalorder %s15, 0
      %p88 = por %p86, %p87
      %p89 = scmp.ne.s32.totalorder %s75, %s76
      %p90 = scmp.eq.s32.totalorder %s16, 2
      %p91 = por %p89, %p90
      %p93 = scmp.ne.s32.totalorder %s76, %s92
      %p94 = scmp.eq.s32.totalorder %s16, 0
      %p95 = por %p93, %p94
      %s97 = sadd.s32 %s96, 1
      %p100 = scmp.eq.s32.totalorder %s10, 2
      %p101 = scmp.ne.s32.totalorder %s96, %s98
      %p102 = scmp.eq.s32.totalorder %s10, 0
      %p103 = por %p101, %p102
      %p104 = scmp.ne.s32.totalorder %s96, %s98
      %p105 = scmp.eq.s32.totalorder %s15, 2
      %p106 = por %p104, %p105
      %p107 = scmp.ne.s32.totalorder %s98, %s99
      %p108 = scmp.eq.s32.totalorder %s15, 0
      %p109 = por %p107, %p108
      %p110 = scmp.ne.s32.totalorder %s98, %s99
      %p111 = scmp.eq.s32.totalorder %s16, 2
      %p112 = por %p110, %p111
      %p114 = scmp.ne.s32.totalorder %s99, %s113
      %p115 = scmp.eq.s32.totalorder %s16, 0
      %p116 = por %p114, %p115
      %p117 = scmp.le.s32.totalorder 1, %s10
      %p118 = scmp.lt.s32.totalorder %s10, 4
      %p119 = pnand %p117, %p118
      %p120 = pneg %p119
      // Predicated region
      $region9: #{tpu_custom_call.1} parent=5 // pred_check
        _
      $region10: #{tpu_custom_call.1} parent=5 // pred_check_branch
        %122 = sbr.rel (%p119) target = $region12
      $region11: #{tpu_custom_call.1} parent=5 // pred_region
        %s123 = ssub.s32 %s10, 1
      $region12: #{tpu_custom_call.1} parent=5 // pred_fallthru
        _
      %p124 = scmp.lt.s32.totalorder %s10, 3
      // Predicated region
      $region13: #{tpu_custom_call.1} parent=5 // pred_check
        %p125 = pneg %p124
      $region14: #{tpu_custom_call.1} parent=5 // pred_check_branch
        %127 = sbr.rel (%p125) target = $region16
      $region15: #{tpu_custom_call.1} parent=5 // pred_region
        // Predicated region
        $region17: #{tpu_custom_call.1} parent=15 // pred_check
          %p128 = pneg %p30
        $region18: #{tpu_custom_call.1} parent=15 // pred_check_branch
          %130 = sbr.rel (%p128) target = $region20
        $region19: #{tpu_custom_call.1} parent=15 // pred_region
          %s131 = smul.u32 2, %s10
          %s132 = ssub.s32 5, %s131
          %p133 = scmp.lt.s32.totalorder %s132, 2
          %s134 = scalar_select %p133, %s132, 2
          %s135 = smul.u32 8, %s134
          %p136 = scmp.lt.s32.totalorder %s131, 4
          %s137 = scalar_select %p136, %s131, 4
          %s138 = smul.addr %s137, 8
          %s139 = scalar_lea.vmem %s0, %s138
          %s140 = smul.u32 2, %s10
          %s141 = ssub.s32 5, %s140
          %p142 = scmp.lt.s32.totalorder %s141, 2
          %s143 = scalar_select %p142, %s141, 2
          %s144 = smul.u32 8, %s143
        $region20: #{tpu_custom_call.1} parent=15 // pred_fallthru
          _
        // Predicated region
        $region21: #{tpu_custom_call.1} parent=15 // pred_check
          %p145 = pneg %p56
        $region22: #{tpu_custom_call.1} parent=15 // pred_check_branch
          %147 = sbr.rel (%p145) target = $region24
        $region23: #{tpu_custom_call.1} parent=15 // pred_region
          %s148 = smul.u32 2, %s10
          %s149 = ssub.s32 5, %s148
          %p150 = scmp.lt.s32.totalorder %s149, 2
          %s151 = scalar_select %p150, %s149, 2
          %s152 = smul.u32 8, %s151
          %p153 = scmp.lt.s32.totalorder %s148, 4
          %s154 = scalar_select %p153, %s148, 4
          %s155 = smul.addr %s154, 8
          %s156 = scalar_lea.vmem %s1, %s155
          %s157 = smul.u32 2, %s10
          %s158 = ssub.s32 5, %s157
          %p159 = scmp.lt.s32.totalorder %s158, 2
          %s160 = scalar_select %p159, %s158, 2
          %s161 = smul.u32 8, %s160
        $region24: #{tpu_custom_call.1} parent=15 // pred_fallthru
          _
        // Predicated region
        $region25: #{tpu_custom_call.1} parent=15 // pred_check
          %p162 = pneg %p82
        $region26: #{tpu_custom_call.1} parent=15 // pred_check_branch
          %164 = sbr.rel (%p162) target = $region28
        $region27: #{tpu_custom_call.1} parent=15 // pred_region
          %s165 = smul.u32 2, %s10
          %s166 = ssub.s32 5, %s165
          %p167 = scmp.lt.s32.totalorder %s166, 2
          %s168 = scalar_select %p167, %s166, 2
          %s169 = smul.u32 8, %s168
          %p170 = scmp.lt.s32.totalorder %s165, 4
          %s171 = scalar_select %p170, %s165, 4
          %s172 = smul.addr %s171, 8
          %s173 = scalar_lea.vmem %s2, %s172
          %s174 = smul.u32 2, %s10
          %s175 = ssub.s32 5, %s174
          %p176 = scmp.lt.s32.totalorder %s175, 2
          %s177 = scalar_select %p176, %s175, 2
          %s178 = smul.u32 8, %s177
        $region28: #{tpu_custom_call.1} parent=15 // pred_fallthru
          _
      $region16: #{tpu_custom_call.1} parent=5 // pred_fallthru
        _
      %p179 = scmp.le.s32.totalorder 1, %s10
      %p180 = scmp.lt.s32.totalorder %s10, 4
      %p181 = pnand %p179, %p180
      %p182 = pneg %p181
      // Predicated region
      $region29: #{tpu_custom_call.1} parent=5 // pred_check
        _
      $region30: #{tpu_custom_call.1} parent=5 // pred_check_branch
        %184 = sbr.rel (%p181) target = $region32
      $region31: #{tpu_custom_call.1} parent=5 // pred_region
        %s185 = ssub.s32 %s10, 1
        %s186 = smul.u32 2, %s15
        %s187 = ssub.s32 5, %s186
        %p188 = scmp.lt.s32.totalorder %s187, 2
        %s189 = scalar_select %p188, %s187, 2
        %s190 = smul.u32 8, %s189
        %p191 = scmp.lt.s32.totalorder %s186, 4
        %s192 = scalar_select %p191, %s186, 4
        %s193 = smul.addr %s192, 8
        %s194 = scalar_lea.vmem %s0, %s193
        %p195 = pneg %p36
        %p196 = pneg %p33
        %s197 = smul.u32 2, %s15
        %s198 = ssub.s32 5, %s197
        %p199 = scmp.lt.s32.totalorder %s198, 2
        %s200 = scalar_select %p199, %s198, 2
        %s201 = smul.u32 8, %s200
        %p202 = scmp.lt.s32.totalorder %s197, 4
        %s203 = scalar_select %p202, %s197, 4
        %s204 = smul.addr %s203, 8
        %s205 = scalar_lea.vmem %s1, %s204
        %p206 = pneg %p62
        %p207 = pneg %p59
        %s208 = smul.u32 2, %s15
        %s209 = ssub.s32 5, %s208
        %p210 = scmp.lt.s32.totalorder %s209, 2
        %s211 = scalar_select %p210, %s209, 2
        %s212 = smul.u32 8, %s211
        %p213 = scmp.lt.s32.totalorder %s208, 4
        %s214 = scalar_select %p213, %s208, 4
        %s215 = smul.addr %s214, 8
        %s216 = scalar_lea.vmem %s2, %s215
        %p217 = pneg %p88
        %p218 = pneg %p85
        %p219 = pneg %p109
        %p220 = pneg %p106
        %s221 = smul.u32 2, %s15
        %s222 = ssub.s32 5, %s221
        %p223 = scmp.lt.s32.totalorder %s222, 2
        %s224 = scalar_select %p223, %s222, 2
        %s225 = smul.u32 8, %s224
        %p226 = scmp.lt.s32.totalorder %s221, 4
        %s227 = scalar_select %p226, %s221, 4
        %s228 = smul.addr %s227, 8
        %s229 = scalar_lea.vmem %s0, %s228
        %s230 = smul.u32 2, %s15
        %s231 = ssub.s32 5, %s230
        %p232 = scmp.lt.s32.totalorder %s231, 2
        %s233 = scalar_select %p232, %s231, 2
        %s234 = smul.u32 8, %s233
        %s235 = smul.u32 2, %s15
        %s236 = ssub.s32 5, %s235
        %p237 = scmp.lt.s32.totalorder %s236, 2
        %s238 = scalar_select %p237, %s236, 2
        %s239 = smul.u32 8, %s238
        %p240 = scmp.lt.s32.totalorder %s235, 4
        %s241 = scalar_select %p240, %s235, 4
        %s242 = smul.addr %s241, 8
        %s243 = scalar_lea.vmem %s1, %s242
        %s244 = smul.u32 2, %s15
        %s245 = ssub.s32 5, %s244
        %p246 = scmp.lt.s32.totalorder %s245, 2
        %s247 = scalar_select %p246, %s245, 2
        %s248 = smul.u32 8, %s247
        %s249 = smul.u32 2, %s15
        %s250 = ssub.s32 5, %s249
        %p251 = scmp.lt.s32.totalorder %s250, 2
        %s252 = scalar_select %p251, %s250, 2
        %s253 = smul.u32 8, %s252
        %p254 = scmp.lt.s32.totalorder %s249, 4
        %s255 = scalar_select %p254, %s249, 4
        %s256 = smul.addr %s255, 8
        %s257 = scalar_lea.vmem %s2, %s256
        %s258 = smul.u32 2, %s15
        %s259 = ssub.s32 5, %s258
        %p260 = scmp.lt.s32.totalorder %s259, 2
        %s261 = scalar_select %p260, %s259, 2
        %s262 = smul.u32 8, %s261
        %p263 = scmp.eq.s32.totalorder %s15, 0
        // Predicated region
        $region33: #{tpu_custom_call.1} parent=31 // pred_check
          %p264 = pneg %p263
        $region34: #{tpu_custom_call.1} parent=31 // pred_check_branch
          %266 = sbr.rel (%p264) target = $region36
        $region35: #{tpu_custom_call.1} parent=31 // pred_region
          %vm267 = vcmask 7168
          %268 = vst.msk [vmem:[#allocation2] sm:$0xff] %vm267, 0.0
          %269 = vst.msk [vmem:[#allocation2 + $0x8] sm:$0xff] %vm267, 0.0
        $region36: #{tpu_custom_call.1} parent=31 // pred_fallthru
          _
        %v270 = vld [vmem:[%s229] sm:$0xff]
        %v271 = vld [vmem:[%s229 + $0x8] sm:$0xff]
        %v272 = vld [vmem:[%s243] sm:$0xff]
        %v273 = vld [vmem:[%s243 + $0x8] sm:$0xff]
        %v274 = vld [vmem:[%s257] sm:$0xff]
        %v275 = vld [vmem:[%s257 + $0x8] sm:$0xff]
        %v276 = vsub.f32 %v270, %v272
        %v277 = vsub.f32 %v271, %v273
        %v278 = vadd.f32 %v276, 1e-06
        %v279 = vadd.f32 %v277, 1e-06
        %v280 = vmul.f32 %v278, %v278
        %v281 = vmul.f32 %v279, %v279
        %vm282 = vcmask 261120
        %v283 = vsel %vm282, %v280, 0.0
        %284 = vadd.xlane.f32.xlu0 %v283
        %v285 = vpop.xlane.xlu0 %284
        %v286 = vsel %vm282, %v281, 0.0
        %287 = vadd.xlane.f32.xlu0 %v286
        %v288 = vpop.xlane.xlu0 %287
        %v289 = vrsqrt.pop %v285
        %v290 = vmul.f32 %v289, %v285
        %v291 = vmul.f32 %v290, %v289
        %v292 = vmul.f32 0.5, %v291
        %v293 = vsub.f32 1.5, %v292
        %v294 = vmul.f32 %v289, %v293
        %v295 = vmul.f32 %v285, %v294
        %vm296 = vcmp.eq.f32.partialorder %v285, inf
        %v297 = vsel %vm296, %v285, %v295
        %vm298 = vcmp.eq.f32.partialorder %v285, 0.0
        %v299 = vand.u32 %v285, 2147483648
        %v300 = vsel %vm298, %v299, %v297
        %v301 = vrsqrt.pop %v288
        %v302 = vmul.f32 %v301, %v288
        %v303 = vmul.f32 %v302, %v301
        %v304 = vmul.f32 0.5, %v303
        %v305 = vsub.f32 1.5, %v304
        %v306 = vmul.f32 %v301, %v305
        %v307 = vmul.f32 %v288, %v306
        %vm308 = vcmp.eq.f32.partialorder %v288, inf
        %v309 = vsel %vm308, %v288, %v307
        %vm310 = vcmp.eq.f32.partialorder %v288, 0.0
        %v311 = vand.u32 %v288, 2147483648
        %v312 = vsel %vm310, %v311, %v309
        %v313 = vsub.f32 1.25, %v300
        %v314 = vsub.f32 1.25, %v312
        %v315 = vmax.f32 %v313, 0.0
        %v316 = vmax.f32 %v314, 0.0
        %v317 = vsub.f32 1.0, %v274
        %v318 = vsub.f32 1.0, %v275
        %v319 = vmul.f32 %v317, %v285
        %v320 = vmul.f32 %v318, %v288
        %v321 = vmul.f32 %v315, %v315
        %v322 = vmul.f32 %v316, %v316
        %v323 = vmul.f32 %v274, %v321
        %v324 = vmul.f32 %v275, %v322
        %v325 = vadd.f32 %v319, %v323
        %v326 = vadd.f32 %v320, %v324
        %v327 = vlaneseq
        %v328 = vshrl.u32 %v327, 7
        %v329 = vadd.s32 %v328, 8
        %s330 = smul.u32 %s15, 16
        %v331 = vstv %s330
        %v332 = vadd.s32 %v328, %v331
        %v333 = vadd.s32 %v329, %v331
        %vm334 = vcmp.lt.s32.totalorder %v332, 40
        %vm335 = vcmp.lt.s32.totalorder %v333, 40
        %v336 = vsel %vm334, %v325, 0.0
        %v337 = vsel %vm335, %v326, 0.0
        %v338 = vld [vmem:[#allocation2] sm:$0xff]
        %v339 = vld [vmem:[#allocation2 + $0x8] sm:$0xff]
        %v340 = vadd.f32 %v338, %v336
        %v341 = vadd.f32 %v339, %v337
        %vm342 = vcmask 7168
        %343 = vst.msk [vmem:[#allocation2] sm:$0xff] %vm342, %v340
        %344 = vst.msk [vmem:[#allocation2 + $0x8] sm:$0xff] %vm342, %v341
        %p345 = scmp.eq.s32.totalorder %s15, 2
        // Predicated region
        $region37: #{tpu_custom_call.1} parent=31 // pred_check
          %p346 = pneg %p345
        $region38: #{tpu_custom_call.1} parent=31 // pred_check_branch
          %348 = sbr.rel (%p346) target = $region40
        $region39: #{tpu_custom_call.1} parent=31 // pred_region
          %v349 = vld [vmem:[#allocation2] sm:$0xff]
          %v350 = vld [vmem:[#allocation2 + $0x8] sm:$0xff]
          %v351 = vsel %vm342, %v349, 0.0
          %v352 = vsel %vm342, %v350, 0.0
          %v353 = vadd.f32 %v351, %v352
          %354 = vadd.xlane.f32.xlu0 %v353
          %v355 = vpop.xlane.xlu0 %354
          %v356 = vrot.slane %v355, 4
          %v357 = vadd.f32 %v355, %v356
          %v358 = vrot.slane %v357, 2
          %v359 = vadd.f32 %v357, %v358
          %v360 = vrot.slane %v359, 1
          %v361 = vadd.f32 %v359, %v360
          %s362 = vtos %v361
          %v363 = vrcp.pop 40.0
          %v364 = vmul.f32 40.0, %v363
          %v365 = vsub.f32 1.0, %v364
          %v366 = vmul.f32 %v363, %v365
          %v367 = vadd.f32 %v363, %v366
          %vm368 = vweird.f32 %v363
          %v369 = vsel %vm368, %v363, %v367
          %s370 = vtos %v369
          %s371 = smul.f32 %s362, %s370
          %v372 = vstv %s371
          %vm373 = vcmask 0
          %374 = vst.msk [vmem:[#allocation3] sm:$0x1] %vm373, %v372
        $region40: #{tpu_custom_call.1} parent=31 // pred_fallthru
          _
        // Predicated region
        $region41: #{tpu_custom_call.1} parent=31 // pred_check
          %p375 = pneg %p106
        $region42: #{tpu_custom_call.1} parent=31 // pred_check_branch
          %377 = sbr.rel (%p375) target = $region44
        $region43: #{tpu_custom_call.1} parent=31 // pred_region
          %379 = vsyncadd [#allocation4], 0
          %s381 = sshll.u32 [#allocation3], 4
          %s382 = int_to_ptr.vmem [resolvable:$true] %s381
          %s383 = sshll.u32 %s3, 4
          %s384 = int_to_ptr.hbm [resolvable:$true] %s383
          %386 = dma.vmem_to_hbm [thread:$0]  %s382, 16, %s384, [#allocation4]
        $region44: #{tpu_custom_call.1} parent=31 // pred_fallthru
          _
        // Predicated region
        $region45: #{tpu_custom_call.1} parent=31 // pred_check
          %p387 = pneg %p106
        $region46: #{tpu_custom_call.1} parent=31 // pred_check_branch
          %389 = sbr.rel (%p387) target = $region48
        $region47: #{tpu_custom_call.1} parent=31 // pred_region
          %391 = dma.done [#allocation4], 16
        $region48: #{tpu_custom_call.1} parent=31 // pred_fallthru
          _
      $region32: #{tpu_custom_call.1} parent=5 // pred_fallthru
        _
      %p392 = scmp.le.s32.totalorder 2, %s10
      // Predicated region
      $region49: #{tpu_custom_call.1} parent=5 // pred_check
        %p393 = pneg %p392
      $region50: #{tpu_custom_call.1} parent=5 // pred_check_branch
        %395 = sbr.rel (%p393) target = $region52
      $region51: #{tpu_custom_call.1} parent=5 // pred_region
        %s396 = ssub.s32 %s10, 2
      $region52: #{tpu_custom_call.1} parent=5 // pred_fallthru
        _
    $region6: #{tpu_custom_call.1} parent=1 // loop_footer
      %s14 = sadd.s32 1, %s10
    $region7: #{tpu_custom_call.1} parent=1 // loop_footer_branch
      %9 = sbr.rel target = $region3
    $region8: #{tpu_custom_call.1} parent=1 // loop_exit
      _
    %397 = vsyncpa [#allocation4], 1
    %s398 = scalar_lea.sflag [#allocation4], 1
    %399 = vsyncpa %s398, 1

</llo_original>
